<compile_context>
chip_gen: v5e
topology: v5e:2x2
jax: 0.10.0
libtpu: 0.0.40
codegen_flags: <defaults>
</compile_context>

<pallas_src>
import functools

import jax
import jax.numpy as jnp
from jax.experimental import pallas as pl
from jax.experimental.pallas import tpu as pltpu


def _round_up(x, m):
    return ((x + m - 1) // m) * m


def gat_kernel(s_src_ref, s_dst_ref, ebias_ref, wh_ref, out_ref, *, alpha):
    """One grid step = one tile of source rows; dst axis kept whole."""
    f32 = jnp.float32
    bf16 = jnp.bfloat16

    # Attention logits, f32 path:
    #   e[i, j] = s_src[i] + s_dst[j] + ebias[i, j]
    # ebias is bf16 (edge score where connected, -9e15 where masked); the add
    # promotes to f32.  Every real row has a finite self-loop logit, so masked
    # entries exponentiate to exactly 0 after the row softmax.
    e = s_src_ref[...] + s_dst_ref[...] + ebias_ref[...].astype(f32)   # (tm, Np)
    e = jnp.where(e > 0, e, alpha * e)                                 # LeakyReLU

    # Row softmax (torch dim=1).
    m = jnp.max(e, axis=-1, keepdims=True)
    p = jnp.exp(e - m)
    att = p * pl.reciprocal(jnp.sum(p, axis=-1, keepdims=True), approx=True)

    # attention @ Wh — the one real MXU matmul (bf16 operands, f32 accumulate).
    hp = jnp.dot(att.astype(bf16), wh_ref[...], preferred_element_type=f32)

    # concat=True branch -> ELU (clamp the exp argument to avoid transient inf).
    out_ref[...] = jnp.where(
        hp > 0, hp, jnp.exp(jnp.minimum(hp, 0.0)) - 1.0).astype(out_ref.dtype)


def gat_forward(h, adj, edge_attr, W, a, *, alpha=0.2, block_rows=256):
    """Pallas-backed GraphAttentionLayer.forward (concat=True, eval mode)."""
    N, f_in = h.shape
    f_out = W.shape[1]
    f_pad = _round_up(f_out, 128)                 # lane-dense output width

    # Split the attention vector a = [a1 ; a2 ; a3].
    a1 = a[:f_out, :]                             # (f_out, 1)
    a2 = a[f_out:2 * f_out, :]                    # (f_out, 1)
    a3 = a[2 * f_out:, 0]                         # (edge_dim,)

    # Row-tile size: >= 2 grid steps when N allows (megacore), tiles a multiple
    # of 128 (sublane/lane friendly, fills the MXU M dimension on all gens).
    half = _round_up(pl.cdiv(N, 2), 128)
    tm = max(128, min(block_rows, half))
    n_pad = _round_up(N, tm)
    grid = (n_pad // tm,)

    h32 = h.astype(jnp.float32)
    W32 = W.astype(jnp.float32)

    # --- Wrapper-side precompute (hoisted out of the per-tile kernel) -------
    # Wh, zero-padded to (n_pad, f_pad), bf16 MXU RHS.  Padded rows/cols are 0.
    wh = jnp.zeros((n_pad, f_pad), jnp.float32).at[:N, :f_out].set(h32 @ W32)
    wh = wh.astype(jnp.bfloat16)

    # Logit row/column terms (f32, tiny).  Padded entries are 0 (masked anyway
    # by the -9e15 bias columns).
    s_src = jnp.zeros((n_pad, 1), jnp.float32).at[:N, :].set(h32 @ (W32 @ a1))
    s_dst = jnp.zeros((1, n_pad), jnp.float32).at[:, :N].set((h32 @ (W32 @ a2)).T)

    # Merged additive bias plane: -9e15 everywhere, 0 on the diagonal (self
    # loops) and at reverse-edge positions, edge score edge_attr@a3 at [src,dst].
    # Single scatter chain — no intermediate (N, N) edge_score / eye / mask.
    src, dst = adj[0], adj[1]
    diag = jnp.arange(N)
    ebias = jnp.full((n_pad, n_pad), -9.0e15, jnp.float32)
    ebias = ebias.at[diag, diag].set(0.0)
    ebias = ebias.at[dst, src].set(0.0)
    ebias = ebias.at[src, dst].set(edge_attr.astype(jnp.float32) @ a3)
    ebias = ebias.astype(jnp.bfloat16)            # halve the only O(N^2) stream

    # VMEM budget derived from the actual footprint (+headroom), capped so it
    # stays comfortable even on v7x's 64 MiB/TC.
    streamed = 2 * (tm * n_pad * 2 + tm * 4 + tm * f_pad * 4)   # double-buffered
    resident = n_pad * f_pad * 2 + n_pad * 4 + tm * 4
    vmem_limit = int(min(max(2 * (streamed + resident) + (2 << 20), 8 << 20),
                         32 << 20))

    kernel = functools.partial(gat_kernel, alpha=float(alpha))

    out_pad = pl.pallas_call(
        kernel,
        out_shape=jax.ShapeDtypeStruct((n_pad, f_pad), jnp.float32),
        grid_spec=pltpu.PrefetchScalarGridSpec(
            num_scalar_prefetch=0,
            grid=grid,
            in_specs=[
                pl.BlockSpec((tm, 1), lambda i: (i, 0)),         # s_src row tile
                pl.BlockSpec((1, n_pad), lambda i: (0, 0)),      # s_dst (resident)
                pl.BlockSpec((tm, n_pad), lambda i: (i, 0)),     # ebias row tile (bf16)
                pl.BlockSpec((n_pad, f_pad), lambda i: (0, 0)),  # Wh (resident, bf16)
            ],
            out_specs=pl.BlockSpec((tm, f_pad), lambda i: (i, 0)),
        ),
        compiler_params=pltpu.CompilerParams(
            dimension_semantics=("parallel",),
            vmem_limit_bytes=vmem_limit,
        ),
    )(s_src, s_dst, ebias, wh)

    return out_pad[:N, :f_out]


def gat_reference(h, adj, edge_attr, W, a, *, alpha=0.2):
    """Pure-JAX f32 reference replicating the PyTorch forward (eval mode)."""
    N = h.shape[0]
    f_out = W.shape[1]
    wh = h @ W
    a1 = a[:f_out, :]
    a2 = a[f_out:2 * f_out, :]
    a3 = a[2 * f_out:, 0]
    e = wh @ a1 + (wh @ a2).T
    edge_score = jnp.zeros((N, N), jnp.float32).at[adj[0], adj[1]].set(edge_attr @ a3)
    e = e + edge_score
    e = jnp.where(e > 0, e, alpha * e)
    mask = jnp.eye(N).at[adj[0], adj[1]].set(1.0).at[adj[1], adj[0]].set(1.0)
    e = jnp.where(mask > 0, e, -9.0e15)
    att = jax.nn.softmax(e, axis=1)
    hp = att @ wh
    return jnp.where(hp > 0, hp, jnp.exp(jnp.minimum(hp, 0.0)) - 1.0)


if __name__ == "__main__":
    # Shapes consistent with the module: N nodes, in_features=8, out_features=16,
    # edge_dim=8 (== in_features, required by edge_attr_repeated), E edges.
    N, F_IN, F_OUT, EDGE_DIM, E = 256, 8, 16, 8, 48
    ALPHA = 0.2

    key = jax.random.PRNGKey(0)
    k_h, k_e, k_w, k_a = jax.random.split(key, 4)

    h = jax.random.normal(k_h, (N, F_IN), dtype=jnp.float32)
    edge_attr = jax.random.normal(k_e, (E, EDGE_DIM), dtype=jnp.float32)

    # Simple chain of unique (source, target) edges.
    adj = jnp.stack([jnp.arange(E, dtype=jnp.int32),
                     jnp.arange(1, E + 1, dtype=jnp.int32)])

    # xavier_uniform_ with gain=1.414 (deterministic synthetic init).
    gain = 1.414
    bw = gain * (6.0 / (F_IN + F_OUT)) ** 0.5
    W = jax.random.uniform(k_w, (F_IN, F_OUT), jnp.float32, -bw, bw)
    ba = gain * (6.0 / (2 * F_OUT + EDGE_DIM + 1)) ** 0.5
    a = jax.random.uniform(k_a, (2 * F_OUT + EDGE_DIM, 1), jnp.float32, -ba, ba)

    out = gat_forward(h, adj, edge_attr, W, a, alpha=ALPHA)
    out = jax.block_until_ready(out)

    ref = gat_reference(h, adj, edge_attr, W, a, alpha=ALPHA)
    assert out.shape == (N, F_OUT)
    # Kernel uses bf16 MXU operands + bf16 edge-score bias + approx reciprocal,
    # compared against a full-f32 reference -> tolerance set accordingly.
    assert jnp.allclose(out, ref, rtol=2e-2, atol=2e-2), "mismatch vs JAX reference"

    print("KERNEL_OK")
</pallas_src>

<mosaic_0001>
module attributes {stable_mosaic.version = 11 : i64} {
  func.func @gat_kernel(%arg0: i32, %arg1: memref<128x1xf32, #tpu.memory_space<vmem>>, %arg2: memref<1x256xf32, #tpu.memory_space<vmem>>, %arg3: memref<128x256xbf16, #tpu.memory_space<vmem>>, %arg4: memref<256x128xbf16, #tpu.memory_space<vmem>>, %arg5: memref<128x128xf32, #tpu.memory_space<vmem>>) attributes {dimension_semantics = [#tpu.dimension_semantics<parallel>], iteration_bounds = array<i64: 2>, scalar_prefetch = 0 : i64, scratch_operands = 0 : i64, tpu.core_type = #tpu.core_type<tc>, window_params = [{transform_indices = @transform_0, window_bounds = array<i64: 128, 1>}, {pipeline_mode = #tpu.pipeline_mode<synchronous>, transform_indices = @transform_1, window_bounds = array<i64: 1, 256>}, {transform_indices = @transform_2, window_bounds = array<i64: 128, 256>}, {pipeline_mode = #tpu.pipeline_mode<synchronous>, transform_indices = @transform_3, window_bounds = array<i64: 256, 128>}, {transform_indices = @transform_4, window_bounds = array<i64: 128, 128>}]} {
    %c0 = arith.constant 0 : index
    %c0_0 = arith.constant 0 : index
    %0 = vector.load %arg1[%c0, %c0_0] : memref<128x1xf32, #tpu.memory_space<vmem>>, vector<128x1xf32>
    %c0_1 = arith.constant 0 : index
    %c0_2 = arith.constant 0 : index
    %1 = vector.load %arg2[%c0_1, %c0_2] : memref<1x256xf32, #tpu.memory_space<vmem>>, vector<1x256xf32>
    %2 = vector.broadcast %0 : vector<128x1xf32> to vector<128x256xf32>
    %3 = vector.broadcast %1 : vector<1x256xf32> to vector<128x256xf32>
    %4 = arith.addf %2, %3 : vector<128x256xf32>
    %c0_3 = arith.constant 0 : index
    %c0_4 = arith.constant 0 : index
    %5 = vector.load %arg3[%c0_3, %c0_4] : memref<128x256xbf16, #tpu.memory_space<vmem>>, vector<128x256xbf16>
    %6 = arith.extf %5 : vector<128x256xbf16> to vector<128x256xf32>
    %7 = arith.addf %4, %6 : vector<128x256xf32>
    %cst = arith.constant 0.000000e+00 : f32
    %8 = vector.broadcast %cst : f32 to vector<128x256xf32>
    %9 = arith.cmpf ogt, %7, %8 : vector<128x256xf32>
    %cst_5 = arith.constant 2.000000e-01 : f32
    %10 = vector.broadcast %cst_5 : f32 to vector<128x256xf32>
    %11 = arith.mulf %10, %7 : vector<128x256xf32>
    %12 = arith.select %9, %7, %11 : vector<128x256xi1>, vector<128x256xf32>
    %cst_6 = arith.constant dense<0xFF800000> : vector<128xf32>
    %13 = vector.multi_reduction <maximumf>, %12, %cst_6 [1] : vector<128x256xf32> to vector<128xf32>
    %14 = vector.shape_cast %13 : vector<128xf32> to vector<128x1xf32>
    %15 = vector.broadcast %14 : vector<128x1xf32> to vector<128x256xf32>
    %16 = arith.subf %12, %15 : vector<128x256xf32>
    %17 = math.exp %16 : vector<128x256xf32>
    %cst_7 = arith.constant dense<0.000000e+00> : vector<128xf32>
    %18 = vector.multi_reduction <add>, %17, %cst_7 [1] : vector<128x256xf32> to vector<128xf32>
    %19 = vector.shape_cast %18 : vector<128xf32> to vector<128x1xf32>
    %20 = tpu.reciprocal %19 {approx = true} : vector<128x1xf32> -> vector<128x1xf32>
    %21 = vector.broadcast %20 : vector<128x1xf32> to vector<128x256xf32>
    %22 = arith.mulf %17, %21 : vector<128x256xf32>
    %23 = arith.truncf %22 : vector<128x256xf32> to vector<128x256xbf16>
    %c0_8 = arith.constant 0 : index
    %c0_9 = arith.constant 0 : index
    %24 = vector.load %arg4[%c0_8, %c0_9] : memref<256x128xbf16, #tpu.memory_space<vmem>>, vector<256x128xbf16>
    %cst_10 = arith.constant dense<0.000000e+00> : vector<128x128xf32>
    %25 = tpu.matmul %23, %24, %cst_10 {dimension_numbers = #tpu.dot_dimension_numbers<[1], [0], [0], [1], [0, 0, 1, 1], [], []>} : vector<128x256xbf16>, vector<256x128xbf16>, vector<128x128xf32> -> vector<128x128xf32>
    %cst_11 = arith.constant 0.000000e+00 : f32
    %26 = vector.broadcast %cst_11 : f32 to vector<128x128xf32>
    %27 = arith.cmpf ogt, %25, %26 : vector<128x128xf32>
    %cst_12 = arith.constant 0.000000e+00 : f32
    %28 = vector.broadcast %cst_12 : f32 to vector<128x128xf32>
    %29 = arith.minimumf %25, %28 : vector<128x128xf32>
    %30 = math.exp %29 : vector<128x128xf32>
    %cst_13 = arith.constant 1.000000e+00 : f32
    %31 = vector.broadcast %cst_13 : f32 to vector<128x128xf32>
    %32 = arith.subf %30, %31 : vector<128x128xf32>
    %33 = arith.select %27, %25, %32 : vector<128x128xi1>, vector<128x128xf32>
    %c0_14 = arith.constant 0 : index
    %c0_15 = arith.constant 0 : index
    %34 = vector.load %arg5[%c0_14, %c0_15] : memref<128x128xf32, #tpu.memory_space<vmem>>, vector<128x128xf32>
    tpu.vector_store %arg5[%c0_14, %c0_15], %33 {strides = array<i32>} : memref<128x128xf32, #tpu.memory_space<vmem>>, vector<128x128xf32>,
    return
  }
  func.func @transform_0(%arg0: i32) -> (i32, i32) {
    %c0_i32 = arith.constant 0 : i32
    %c0_i32_0 = arith.constant 0 : i32
    return %arg0, %c0_i32 : i32, i32
  }
  func.func @transform_1(%arg0: i32) -> (i32, i32) {
    %c0_i32 = arith.constant 0 : i32
    %c0_i32_0 = arith.constant 0 : i32
    %c0_i32_1 = arith.constant 0 : i32
    return %c0_i32, %c0_i32_0 : i32, i32
  }
  func.func @transform_2(%arg0: i32) -> (i32, i32) {
    %c0_i32 = arith.constant 0 : i32
    %c0_i32_0 = arith.constant 0 : i32
    return %arg0, %c0_i32 : i32, i32
  }
  func.func @transform_3(%arg0: i32) -> (i32, i32) {
    %c0_i32 = arith.constant 0 : i32
    %c0_i32_0 = arith.constant 0 : i32
    %c0_i32_1 = arith.constant 0 : i32
    return %c0_i32, %c0_i32_0 : i32, i32
  }
  func.func @transform_4(%arg0: i32) -> (i32, i32) {
    %c0_i32 = arith.constant 0 : i32
    %c0_i32_0 = arith.constant 0 : i32
    return %arg0, %c0_i32 : i32, i32
  }
}

</mosaic_0001>

<llo_original>
// kernel: tpu_custom_call.1
$region0: #{tpu_custom_call.1}
  #allocation0 [shape = 'u32[]', space=smem, size = 0x4, offset = 0x4, fixed_abs, tag = 'smem constant byte address 0x4 - core index']
  #allocation1 [shape = 'u32[72,128]{1,0:T(1,128)}', space=vmem, size = 0x9000, scoped, tag = 'internal scratch']
  %s0 = inlined_call_operand.vmem [shape: f32[256,1], index: 0, kind: input, shape index: {}]
  %s1 = inlined_call_operand.vmem [shape: f32[1,256], index: 1, kind: input, shape index: {}]
  %s2 = inlined_call_operand.vmem [shape: bf16[256,256], index: 2, kind: input, shape index: {}]
  %s3 = inlined_call_operand.hbm [shape: bf16[256,128], index: 3, kind: input, shape index: {}]
  %s4 = inlined_call_operand.hbm [shape: f32[256,128], index: 4, kind: output, shape index: {}]
  %s5 = sld [smem:[#allocation0]]
  $region53: #{tpu_custom_call.1} parent=0
    _
  %s7 = ssub.s32 1, %s5
  %s8 = scalar_select 0, %s7, %s5
  $region1: #{tpu_custom_call.1} parent=0
    #allocation2 [shape = 'u8[65536]{0}', space=vmem, size = 0x10000, scoped, tag = 'input window, operand 3, single buffered']
    #allocation3 [shape = 's32[2]{0}', space=sflag, size = 0x8, scoped, tag = 'scoped memory for tpu_custom_call.1']
    #allocation4 [shape = 's32[2]{0}', space=sflag, size = 0x8, scoped, tag = 'scoped memory for tpu_custom_call.1']
    #allocation5 [shape = 'u8[131072]{0}', space=vmem, size = 0x20000, scoped, tag = 'output window, operand 0']
    %9 = vsyncpa [#allocation3], 0
    %10 = vsyncpa [#allocation4], 0
    %s11 = scalar_lea.sflag [#allocation4], 1
    %12 = vsyncpa %s11, 0
    loop: start=0, step=1, limit=4
    $region2: #{tpu_custom_call.1} parent=1 // loop_pre_header
      _
    $region3: #{tpu_custom_call.1} parent=1 // loop_header
      %s14 = sphi 0, %s18
      %p15 = scmp.ge.s32.totalorder %s14, 4
      %s24 = sphi 0, %s26
      %s27 = sphi 0, %s24
      %s28 = sphi 0, %s27
      %s44 = sphi 0, %s28
      %s48 = sphi 0, %s48
      %s50 = sphi 0, %s48
      %s51 = sphi 0, %s50
      %s65 = sphi 0, %s51
      %s71 = sphi 0, %s73
      %s74 = sphi 0, %s71
      %s75 = sphi 0, %s74
      %s91 = sphi 0, %s75
      %s95 = sphi 0, %s95
      %s97 = sphi 0, %s95
      %s98 = sphi 0, %s97
      %s112 = sphi 0, %s98
      %s118 = sphi 0, %s120
      %s121 = sphi 0, %s118
      %s122 = sphi 0, %s121
      %s138 = sphi 0, %s122
    $region4: #{tpu_custom_call.1} parent=1 // loop_header_branch
      %17 = sbr.rel (%p15) target = $region8
    $region5: #{tpu_custom_call.1} parent=1 // loop_body
      %s19 = ssub.s32 %s14, 1
      %s20 = ssub.s32 %s14, 2
      %s21 = sadd.s32 %s14, 1
      %s22 = ssub.s32 %s14, %s21
      %p23 = scmp.eq.s32.totalorder %s22, 0
      %s25 = sadd.s32 %s24, 1
      %s26 = scalar_select %p23, %s24, %s25
      %p29 = pneg %p23
      %p30 = scmp.eq.s32.totalorder %s14, 1
      %p31 = por %p29, %p30
      %p32 = scmp.ne.s32.totalorder %s24, %s27
      %p33 = scmp.eq.s32.totalorder %s14, 0
      %p34 = por %p32, %p33
      %p35 = scmp.ne.s32.totalorder %s24, %s27
      %p36 = scmp.eq.s32.totalorder %s19, 1
      %p37 = por %p35, %p36
      %p38 = scmp.ne.s32.totalorder %s27, %s28
      %p39 = scmp.eq.s32.totalorder %s19, 0
      %p40 = por %p38, %p39
      %p41 = scmp.ne.s32.totalorder %s27, %s28
      %p42 = scmp.eq.s32.totalorder %s20, 1
      %p43 = por %p41, %p42
      %p45 = scmp.ne.s32.totalorder %s28, %s44
      %p46 = scmp.eq.s32.totalorder %s20, 0
      %p47 = por %p45, %p46
      %s49 = sadd.s32 %s48, 1
      %p52 = scmp.eq.s32.totalorder %s14, 1
      %p53 = scmp.ne.s32.totalorder %s48, %s50
      %p54 = scmp.eq.s32.totalorder %s14, 0
      %p55 = por %p53, %p54
      %p56 = scmp.ne.s32.totalorder %s48, %s50
      %p57 = scmp.eq.s32.totalorder %s19, 1
      %p58 = por %p56, %p57
      %p59 = scmp.ne.s32.totalorder %s50, %s51
      %p60 = scmp.eq.s32.totalorder %s19, 0
      %p61 = por %p59, %p60
      %p62 = scmp.ne.s32.totalorder %s50, %s51
      %p63 = scmp.eq.s32.totalorder %s20, 1
      %p64 = por %p62, %p63
      %p66 = scmp.ne.s32.totalorder %s51, %s65
      %p67 = scmp.eq.s32.totalorder %s20, 0
      %p68 = por %p66, %p67
      %s69 = ssub.s32 %s14, %s21
      %p70 = scmp.eq.s32.totalorder %s69, 0
      %s72 = sadd.s32 %s71, 1
      %s73 = scalar_select %p70, %s71, %s72
      %p76 = pneg %p70
      %p77 = scmp.eq.s32.totalorder %s14, 1
      %p78 = por %p76, %p77
      %p79 = scmp.ne.s32.totalorder %s71, %s74
      %p80 = scmp.eq.s32.totalorder %s14, 0
      %p81 = por %p79, %p80
      %p82 = scmp.ne.s32.totalorder %s71, %s74
      %p83 = scmp.eq.s32.totalorder %s19, 1
      %p84 = por %p82, %p83
      %p85 = scmp.ne.s32.totalorder %s74, %s75
      %p86 = scmp.eq.s32.totalorder %s19, 0
      %p87 = por %p85, %p86
      %p88 = scmp.ne.s32.totalorder %s74, %s75
      %p89 = scmp.eq.s32.totalorder %s20, 1
      %p90 = por %p88, %p89
      %p92 = scmp.ne.s32.totalorder %s75, %s91
      %p93 = scmp.eq.s32.totalorder %s20, 0
      %p94 = por %p92, %p93
      %s96 = sadd.s32 %s95, 1
      %p99 = scmp.eq.s32.totalorder %s14, 1
      %p100 = scmp.ne.s32.totalorder %s95, %s97
      %p101 = scmp.eq.s32.totalorder %s14, 0
      %p102 = por %p100, %p101
      %p103 = scmp.ne.s32.totalorder %s95, %s97
      %p104 = scmp.eq.s32.totalorder %s19, 1
      %p105 = por %p103, %p104
      %p106 = scmp.ne.s32.totalorder %s97, %s98
      %p107 = scmp.eq.s32.totalorder %s19, 0
      %p108 = por %p106, %p107
      %p109 = scmp.ne.s32.totalorder %s97, %s98
      %p110 = scmp.eq.s32.totalorder %s20, 1
      %p111 = por %p109, %p110
      %p113 = scmp.ne.s32.totalorder %s98, %s112
      %p114 = scmp.eq.s32.totalorder %s20, 0
      %p115 = por %p113, %p114
      %s116 = ssub.s32 %s14, %s21
      %p117 = scmp.eq.s32.totalorder %s116, 0
      %s119 = sadd.s32 %s118, 1
      %s120 = scalar_select %p117, %s118, %s119
      %p123 = pneg %p117
      %p124 = scmp.eq.s32.totalorder %s14, 1
      %p125 = por %p123, %p124
      %p126 = scmp.ne.s32.totalorder %s118, %s121
      %p127 = scmp.eq.s32.totalorder %s14, 0
      %p128 = por %p126, %p127
      %p129 = scmp.ne.s32.totalorder %s118, %s121
      %p130 = scmp.eq.s32.totalorder %s19, 1
      %p131 = por %p129, %p130
      %p132 = scmp.ne.s32.totalorder %s121, %s122
      %p133 = scmp.eq.s32.totalorder %s19, 0
      %p134 = por %p132, %p133
      %p135 = scmp.ne.s32.totalorder %s121, %s122
      %p136 = scmp.eq.s32.totalorder %s20, 1
      %p137 = por %p135, %p136
      %p139 = scmp.ne.s32.totalorder %s122, %s138
      %p140 = scmp.eq.s32.totalorder %s20, 0
      %p141 = por %p139, %p140
      %p142 = scmp.le.s32.totalorder 1, %s14
      %p143 = scmp.lt.s32.totalorder %s14, 3
      %p144 = pnand %p142, %p143
      %p145 = pneg %p144
      // Predicated region
      $region9: #{tpu_custom_call.1} parent=5 // pred_check
        _
      $region10: #{tpu_custom_call.1} parent=5 // pred_check_branch
        %147 = sbr.rel (%p144) target = $region12
      $region11: #{tpu_custom_call.1} parent=5 // pred_region
        %s148 = ssub.s32 %s14, 1
        // Predicated region
        $region13: #{tpu_custom_call.1} parent=11 // pred_check
          %p149 = pneg %p61
        $region14: #{tpu_custom_call.1} parent=11 // pred_check_branch
          %151 = sbr.rel (%p149) target = $region16
        $region15: #{tpu_custom_call.1} parent=11 // pred_region
          _
        $region16: #{tpu_custom_call.1} parent=11 // pred_fallthru
          _
        // Predicated region
        $region17: #{tpu_custom_call.1} parent=11 // pred_check
          %p152 = pneg %p108
        $region18: #{tpu_custom_call.1} parent=11 // pred_check_branch
          %154 = sbr.rel (%p152) target = $region20
        $region19: #{tpu_custom_call.1} parent=11 // pred_region
          %156 = vsyncadd [#allocation3], 0
          %s157 = sshll.u32 %s3, 4
          %s158 = int_to_ptr.hbm [resolvable:$true] %s157
          %s159 = sshll.u32 [#allocation2], 4
          %s160 = int_to_ptr.vmem [resolvable:$true] %s159
          %165 = dma.hbm_to_vmem [thread:$0]  %s158, 2048, %s160, [#allocation3], 64, 64, 4
        $region20: #{tpu_custom_call.1} parent=11 // pred_fallthru
          _
      $region12: #{tpu_custom_call.1} parent=5 // pred_fallthru
        _
      %p166 = scmp.lt.s32.totalorder %s14, 2
      // Predicated region
      $region21: #{tpu_custom_call.1} parent=5 // pred_check
        %p167 = pneg %p166
      $region22: #{tpu_custom_call.1} parent=5 // pred_check_branch
        %169 = sbr.rel (%p167) target = $region24
      $region23: #{tpu_custom_call.1} parent=5 // pred_region
        // Predicated region
        $region25: #{tpu_custom_call.1} parent=23 // pred_check
          %p170 = pneg %p34
        $region26: #{tpu_custom_call.1} parent=23 // pred_check_branch
          %172 = sbr.rel (%p170) target = $region28
        $region27: #{tpu_custom_call.1} parent=23 // pred_region
          %s173 = smul.u32 16, %s14
          %p174 = scmp.lt.s32.totalorder %s173, 31
          %s175 = scalar_select %p174, %s173, 31
          %s176 = smul.addr %s175, 8
          %s177 = scalar_lea.vmem %s0, %s176
          %s178 = smul.u32 16, %s14
        $region28: #{tpu_custom_call.1} parent=23 // pred_fallthru
          _
        // Predicated region
        $region29: #{tpu_custom_call.1} parent=23 // pred_check
          %p179 = pneg %p81
        $region30: #{tpu_custom_call.1} parent=23 // pred_check_branch
          %181 = sbr.rel (%p179) target = $region32
        $region31: #{tpu_custom_call.1} parent=23 // pred_region
          %s182 = smul.u32 16, %s14
          %p183 = scmp.lt.s32.totalorder %s182, 31
          %s184 = scalar_select %p183, %s182, 31
          %s185 = smul.addr %s184, 2
          %s186 = smul.addr %s185, 4
          %s187 = scalar_lea.vmem %s2, %s186
          %s188 = smul.u32 16, %s14
        $region32: #{tpu_custom_call.1} parent=23 // pred_fallthru
          _
      $region24: #{tpu_custom_call.1} parent=5 // pred_fallthru
        _
      %p189 = scmp.le.s32.totalorder 1, %s14
      %p190 = scmp.lt.s32.totalorder %s14, 3
      %p191 = pnand %p189, %p190
      %p192 = pneg %p191
      // Predicated region
      $region33: #{tpu_custom_call.1} parent=5 // pred_check
        _
      $region34: #{tpu_custom_call.1} parent=5 // pred_check_branch
        %194 = sbr.rel (%p191) target = $region36
      $region35: #{tpu_custom_call.1} parent=5 // pred_region
        %s195 = ssub.s32 %s14, 1
        // Predicated region
        $region37: #{tpu_custom_call.1} parent=35 // pred_check
          %p196 = pneg %p108
        $region38: #{tpu_custom_call.1} parent=35 // pred_check_branch
          %198 = sbr.rel (%p196) target = $region40
        $region39: #{tpu_custom_call.1} parent=35 // pred_region
          %200 = dma.done [#allocation3], 2048
        $region40: #{tpu_custom_call.1} parent=35 // pred_fallthru
          _
        %s201 = smul.u32 16, %s19
        %p202 = scmp.lt.s32.totalorder %s201, 31
        %s203 = scalar_select %p202, %s201, 31
        %s204 = smul.addr %s203, 8
        %s205 = scalar_lea.vmem %s0, %s204
        %p206 = pneg %p40
        %p207 = pneg %p37
        %p208 = pneg %p61
        %p209 = pneg %p58
        %s210 = smul.u32 16, %s19
        %p211 = scmp.lt.s32.totalorder %s210, 31
        %s212 = scalar_select %p211, %s210, 31
        %s213 = smul.addr %s212, 2
        %s214 = smul.addr %s213, 4
        %s215 = scalar_lea.vmem %s2, %s214
        %p216 = pneg %p87
        %p217 = pneg %p84
        %p218 = pneg %p108
        %p219 = pneg %p105
        %p220 = pneg %p134
        %p221 = pneg %p131
        %s222 = sand.u32 %s121, 1
        %s223 = scalar_lea.sflag [#allocation4], %s222
        %s224 = sand.u32 %s121, 1
        %s225 = smul.addr %s224, 128
        %s226 = scalar_lea.vmem [#allocation5], %s225
        %s227 = smul.u32 16, %s19
        %p228 = scmp.lt.s32.totalorder %s227, 31
        %s229 = scalar_select %p228, %s227, 31
        %s230 = smul.addr %s229, 8
        %s231 = scalar_lea.vmem %s0, %s230
        %s232 = smul.u32 16, %s19
        %s233 = smul.u32 16, %s19
        %p234 = scmp.lt.s32.totalorder %s233, 31
        %s235 = scalar_select %p234, %s233, 31
        %s236 = smul.addr %s235, 2
        %s237 = smul.addr %s236, 4
        %s238 = scalar_lea.vmem %s2, %s237
        %s239 = smul.u32 16, %s19
        %s240 = smul.u32 16, %s19
        %v241 = vld [vmem:[%s231] sm:$0xff]
        %v242 = vld [vmem:[%s231 + $0x8] sm:$0xff]
        %v243 = vld [vmem:[%s231 + $0x10] sm:$0xff]
        %v244 = vld [vmem:[%s231 + $0x18] sm:$0xff]
        %v245 = vld [vmem:[%s231 + $0x20] sm:$0xff]
        %v246 = vld [vmem:[%s231 + $0x28] sm:$0xff]
        %v247 = vld [vmem:[%s231 + $0x30] sm:$0xff]
        %v248 = vld [vmem:[%s231 + $0x38] sm:$0xff]
        %v249 = vld [vmem:[%s231 + $0x40] sm:$0xff]
        %v250 = vld [vmem:[%s231 + $0x48] sm:$0xff]
        %v251 = vld [vmem:[%s231 + $0x50] sm:$0xff]
        %v252 = vld [vmem:[%s231 + $0x58] sm:$0xff]
        %v253 = vld [vmem:[%s231 + $0x60] sm:$0xff]
        %v254 = vld [vmem:[%s231 + $0x68] sm:$0xff]
        %v255 = vld [vmem:[%s231 + $0x70] sm:$0xff]
        %v256 = vld [vmem:[%s231 + $0x78] sm:$0xff]
        %v257 = vld [vmem:[%s1] sm:$0x3]
        %259 = vset.pattern.permute.xlu0 0
        %260 = vperm.xlu0 %259, %v241
        %v261 = vpop.permute.xlu0 %260
        %264 = vset.pattern.permute.xlu0 0
        %265 = vperm.xlu0 %264, %v242
        %v266 = vpop.permute.xlu0 %265
        %269 = vset.pattern.permute.xlu0 0
        %270 = vperm.xlu0 %269, %v243
        %v271 = vpop.permute.xlu0 %270
        %274 = vset.pattern.permute.xlu0 0
        %275 = vperm.xlu0 %274, %v244
        %v276 = vpop.permute.xlu0 %275
        %279 = vset.pattern.permute.xlu0 0
        %280 = vperm.xlu0 %279, %v245
        %v281 = vpop.permute.xlu0 %280
        %284 = vset.pattern.permute.xlu0 0
        %285 = vperm.xlu0 %284, %v246
        %v286 = vpop.permute.xlu0 %285
        %289 = vset.pattern.permute.xlu0 0
        %290 = vperm.xlu0 %289, %v247
        %v291 = vpop.permute.xlu0 %290
        %294 = vset.pattern.permute.xlu0 0
        %295 = vperm.xlu0 %294, %v248
        %v296 = vpop.permute.xlu0 %295
        %299 = vset.pattern.permute.xlu0 0
        %300 = vperm.xlu0 %299, %v249
        %v301 = vpop.permute.xlu0 %300
        %304 = vset.pattern.permute.xlu0 0
        %305 = vperm.xlu0 %304, %v250
        %v306 = vpop.permute.xlu0 %305
        %309 = vset.pattern.permute.xlu0 0
        %310 = vperm.xlu0 %309, %v251
        %v311 = vpop.permute.xlu0 %310
        %314 = vset.pattern.permute.xlu0 0
        %315 = vperm.xlu0 %314, %v252
        %v316 = vpop.permute.xlu0 %315
        %319 = vset.pattern.permute.xlu0 0
        %320 = vperm.xlu0 %319, %v253
        %v321 = vpop.permute.xlu0 %320
        %324 = vset.pattern.permute.xlu0 0
        %325 = vperm.xlu0 %324, %v254
        %v326 = vpop.permute.xlu0 %325
        %329 = vset.pattern.permute.xlu0 0
        %330 = vperm.xlu0 %329, %v255
        %v331 = vpop.permute.xlu0 %330
        %334 = vset.pattern.permute.xlu0 0
        %335 = vperm.xlu0 %334, %v256
        %v336 = vpop.permute.xlu0 %335
        %v339 = vperm.slane %v257, 0
        %v340 = vperm.slane %v257, 1
        %v343 = vadd.f32 %v261, %v339
        %v344 = vadd.f32 %v261, %v340
        %v345 = vadd.f32 %v266, %v339
        %v346 = vadd.f32 %v266, %v340
        %v347 = vadd.f32 %v271, %v339
        %v348 = vadd.f32 %v271, %v340
        %v349 = vadd.f32 %v276, %v339
        %v350 = vadd.f32 %v276, %v340
        %v351 = vadd.f32 %v281, %v339
        %v352 = vadd.f32 %v281, %v340
        %v353 = vadd.f32 %v286, %v339
        %v354 = vadd.f32 %v286, %v340
        %v355 = vadd.f32 %v291, %v339
        %v356 = vadd.f32 %v291, %v340
        %v357 = vadd.f32 %v296, %v339
        %v358 = vadd.f32 %v296, %v340
        %v359 = vadd.f32 %v301, %v339
        %v360 = vadd.f32 %v301, %v340
        %v361 = vadd.f32 %v306, %v339
        %v362 = vadd.f32 %v306, %v340
        %v363 = vadd.f32 %v311, %v339
        %v364 = vadd.f32 %v311, %v340
        %v365 = vadd.f32 %v316, %v339
        %v366 = vadd.f32 %v316, %v340
        %v367 = vadd.f32 %v321, %v339
        %v368 = vadd.f32 %v321, %v340
        %v369 = vadd.f32 %v326, %v339
        %v370 = vadd.f32 %v326, %v340
        %v371 = vadd.f32 %v331, %v339
        %v372 = vadd.f32 %v331, %v340
        %v373 = vadd.f32 %v336, %v339
        %v374 = vadd.f32 %v336, %v340
        %v375 = vld [vmem:[%s238] sm:$0xff]
        %v376 = vld [vmem:[%s238 + $0x8] sm:$0xff]
        %v377 = vld [vmem:[%s238 + $0x10] sm:$0xff]
        %v378 = vld [vmem:[%s238 + $0x18] sm:$0xff]
        %v379 = vld [vmem:[%s238 + $0x20] sm:$0xff]
        %v380 = vld [vmem:[%s238 + $0x28] sm:$0xff]
        %v381 = vld [vmem:[%s238 + $0x30] sm:$0xff]
        %v382 = vld [vmem:[%s238 + $0x38] sm:$0xff]
        %v383 = vld [vmem:[%s238 + $0x40] sm:$0xff]
        %v384 = vld [vmem:[%s238 + $0x48] sm:$0xff]
        %v385 = vld [vmem:[%s238 + $0x50] sm:$0xff]
        %v386 = vld [vmem:[%s238 + $0x58] sm:$0xff]
        %v387 = vld [vmem:[%s238 + $0x60] sm:$0xff]
        %v388 = vld [vmem:[%s238 + $0x68] sm:$0xff]
        %v389 = vld [vmem:[%s238 + $0x70] sm:$0xff]
        %v390 = vld [vmem:[%s238 + $0x78] sm:$0xff]
        %v391 = vunpack.c.l.bf16 %v375
        %v392 = vunpack.c.h.bf16 %v375
        %v393 = vunpack.c.l.bf16 %v376
        %v394 = vunpack.c.h.bf16 %v376
        %v395 = vunpack.c.l.bf16 %v377
        %v396 = vunpack.c.h.bf16 %v377
        %v397 = vunpack.c.l.bf16 %v378
        %v398 = vunpack.c.h.bf16 %v378
        %v399 = vunpack.c.l.bf16 %v379
        %v400 = vunpack.c.h.bf16 %v379
        %v401 = vunpack.c.l.bf16 %v380
        %v402 = vunpack.c.h.bf16 %v380
        %v403 = vunpack.c.l.bf16 %v381
        %v404 = vunpack.c.h.bf16 %v381
        %v405 = vunpack.c.l.bf16 %v382
        %v406 = vunpack.c.h.bf16 %v382
        %v407 = vunpack.c.l.bf16 %v383
        %v408 = vunpack.c.h.bf16 %v383
        %v409 = vunpack.c.l.bf16 %v384
        %v410 = vunpack.c.h.bf16 %v384
        %v411 = vunpack.c.l.bf16 %v385
        %v412 = vunpack.c.h.bf16 %v385
        %v413 = vunpack.c.l.bf16 %v386
        %v414 = vunpack.c.h.bf16 %v386
        %v415 = vunpack.c.l.bf16 %v387
        %v416 = vunpack.c.h.bf16 %v387
        %v417 = vunpack.c.l.bf16 %v388
        %v418 = vunpack.c.h.bf16 %v388
        %v419 = vunpack.c.l.bf16 %v389
        %v420 = vunpack.c.h.bf16 %v389
        %v421 = vunpack.c.l.bf16 %v390
        %v422 = vunpack.c.h.bf16 %v390
        %v423 = vadd.f32 %v343, %v391
        %v424 = vadd.f32 %v344, %v392
        %v425 = vadd.f32 %v345, %v393
        %v426 = vadd.f32 %v346, %v394
        %v427 = vadd.f32 %v347, %v395
        %v428 = vadd.f32 %v348, %v396
        %v429 = vadd.f32 %v349, %v397
        %v430 = vadd.f32 %v350, %v398
        %v431 = vadd.f32 %v351, %v399
        %v432 = vadd.f32 %v352, %v400
        %v433 = vadd.f32 %v353, %v401
        %v434 = vadd.f32 %v354, %v402
        %v435 = vadd.f32 %v355, %v403
        %v436 = vadd.f32 %v356, %v404
        %v437 = vadd.f32 %v357, %v405
        %v438 = vadd.f32 %v358, %v406
        %v439 = vadd.f32 %v359, %v407
        %v440 = vadd.f32 %v360, %v408
        %v441 = vadd.f32 %v361, %v409
        %v442 = vadd.f32 %v362, %v410
        %v443 = vadd.f32 %v363, %v411
        %v444 = vadd.f32 %v364, %v412
        %v445 = vadd.f32 %v365, %v413
        %v446 = vadd.f32 %v366, %v414
        %v447 = vadd.f32 %v367, %v415
        %v448 = vadd.f32 %v368, %v416
        %v449 = vadd.f32 %v369, %v417
        %v450 = vadd.f32 %v370, %v418
        %v451 = vadd.f32 %v371, %v419
        %v452 = vadd.f32 %v372, %v420
        %v453 = vadd.f32 %v373, %v421
        %v454 = vadd.f32 %v374, %v422
        %vm455 = vcmp.gt.f32.partialorder %v423, 0.0
        %vm456 = vcmp.gt.f32.partialorder %v424, 0.0
        %vm457 = vcmp.gt.f32.partialorder %v425, 0.0
        %vm458 = vcmp.gt.f32.partialorder %v426, 0.0
        %vm459 = vcmp.gt.f32.partialorder %v427, 0.0
        %vm460 = vcmp.gt.f32.partialorder %v428, 0.0
        %vm461 = vcmp.gt.f32.partialorder %v429, 0.0
        %vm462 = vcmp.gt.f32.partialorder %v430, 0.0
        %vm463 = vcmp.gt.f32.partialorder %v431, 0.0
        %vm464 = vcmp.gt.f32.partialorder %v432, 0.0
        %vm465 = vcmp.gt.f32.partialorder %v433, 0.0
        %vm466 = vcmp.gt.f32.partialorder %v434, 0.0
        %vm467 = vcmp.gt.f32.partialorder %v435, 0.0
        %vm468 = vcmp.gt.f32.partialorder %v436, 0.0
        %vm469 = vcmp.gt.f32.partialorder %v437, 0.0
        %vm470 = vcmp.gt.f32.partialorder %v438, 0.0
        %vm471 = vcmp.gt.f32.partialorder %v439, 0.0
        %vm472 = vcmp.gt.f32.partialorder %v440, 0.0
        %vm473 = vcmp.gt.f32.partialorder %v441, 0.0
        %vm474 = vcmp.gt.f32.partialorder %v442, 0.0
        %vm475 = vcmp.gt.f32.partialorder %v443, 0.0
        %vm476 = vcmp.gt.f32.partialorder %v444, 0.0
        %vm477 = vcmp.gt.f32.partialorder %v445, 0.0
        %vm478 = vcmp.gt.f32.partialorder %v446, 0.0
        %vm479 = vcmp.gt.f32.partialorder %v447, 0.0
        %vm480 = vcmp.gt.f32.partialorder %v448, 0.0
        %vm481 = vcmp.gt.f32.partialorder %v449, 0.0
        %vm482 = vcmp.gt.f32.partialorder %v450, 0.0
        %vm483 = vcmp.gt.f32.partialorder %v451, 0.0
        %vm484 = vcmp.gt.f32.partialorder %v452, 0.0
        %vm485 = vcmp.gt.f32.partialorder %v453, 0.0
        %vm486 = vcmp.gt.f32.partialorder %v454, 0.0
        %v487 = vmul.f32 %v423, 0.2
        %v488 = vmul.f32 %v424, 0.2
        %v489 = vmul.f32 %v425, 0.2
        %v490 = vmul.f32 %v426, 0.2
        %v491 = vmul.f32 %v427, 0.2
        %v492 = vmul.f32 %v428, 0.2
        %v493 = vmul.f32 %v429, 0.2
        %v494 = vmul.f32 %v430, 0.2
        %v495 = vmul.f32 %v431, 0.2
        %v496 = vmul.f32 %v432, 0.2
        %v497 = vmul.f32 %v433, 0.2
        %v498 = vmul.f32 %v434, 0.2
        %v499 = vmul.f32 %v435, 0.2
        %v500 = vmul.f32 %v436, 0.2
        %v501 = vmul.f32 %v437, 0.2
        %v502 = vmul.f32 %v438, 0.2
        %v503 = vmul.f32 %v439, 0.2
        %v504 = vmul.f32 %v440, 0.2
        %v505 = vmul.f32 %v441, 0.2
        %v506 = vmul.f32 %v442, 0.2
        %v507 = vmul.f32 %v443, 0.2
        %v508 = vmul.f32 %v444, 0.2
        %v509 = vmul.f32 %v445, 0.2
        %v510 = vmul.f32 %v446, 0.2
        %v511 = vmul.f32 %v447, 0.2
        %v512 = vmul.f32 %v448, 0.2
        %v513 = vmul.f32 %v449, 0.2
        %v514 = vmul.f32 %v450, 0.2
        %v515 = vmul.f32 %v451, 0.2
        %v516 = vmul.f32 %v452, 0.2
        %v517 = vmul.f32 %v453, 0.2
        %v518 = vmul.f32 %v454, 0.2
        %v519 = vsel %vm455, %v423, %v487
        %v520 = vsel %vm456, %v424, %v488
        %v521 = vsel %vm457, %v425, %v489
        %v522 = vsel %vm458, %v426, %v490
        %v523 = vsel %vm459, %v427, %v491
        %v524 = vsel %vm460, %v428, %v492
        %v525 = vsel %vm461, %v429, %v493
        %v526 = vsel %vm462, %v430, %v494
        %v527 = vsel %vm463, %v431, %v495
        %v528 = vsel %vm464, %v432, %v496
        %v529 = vsel %vm465, %v433, %v497
        %v530 = vsel %vm466, %v434, %v498
        %v531 = vsel %vm467, %v435, %v499
        %v532 = vsel %vm468, %v436, %v500
        %v533 = vsel %vm469, %v437, %v501
        %v534 = vsel %vm470, %v438, %v502
        %v535 = vsel %vm471, %v439, %v503
        %v536 = vsel %vm472, %v440, %v504
        %v537 = vsel %vm473, %v441, %v505
        %v538 = vsel %vm474, %v442, %v506
        %v539 = vsel %vm475, %v443, %v507
        %v540 = vsel %vm476, %v444, %v508
        %v541 = vsel %vm477, %v445, %v509
        %v542 = vsel %vm478, %v446, %v510
        %v543 = vsel %vm479, %v447, %v511
        %v544 = vsel %vm480, %v448, %v512
        %v545 = vsel %vm481, %v449, %v513
        %v546 = vsel %vm482, %v450, %v514
        %v547 = vsel %vm483, %v451, %v515
        %v548 = vsel %vm484, %v452, %v516
        %v549 = vsel %vm485, %v453, %v517
        %v550 = vsel %vm486, %v454, %v518
        %v551 = vmax.f32 %v519, %v520
        %552 = vmax.xlane.f32.xlu0 %v551
        %v553 = vpop.xlane.xlu0 %552
        %v554 = vmax.f32 %v521, %v522
        %555 = vmax.xlane.f32.xlu0 %v554
        %v556 = vpop.xlane.xlu0 %555
        %v557 = vmax.f32 %v523, %v524
        %558 = vmax.xlane.f32.xlu0 %v557
        %v559 = vpop.xlane.xlu0 %558
        %v560 = vmax.f32 %v525, %v526
        %561 = vmax.xlane.f32.xlu0 %v560
        %v562 = vpop.xlane.xlu0 %561
        %v563 = vmax.f32 %v527, %v528
        %564 = vmax.xlane.f32.xlu0 %v563
        %v565 = vpop.xlane.xlu0 %564
        %v566 = vmax.f32 %v529, %v530
        %567 = vmax.xlane.f32.xlu0 %v566
        %v568 = vpop.xlane.xlu0 %567
        %v569 = vmax.f32 %v531, %v532
        %570 = vmax.xlane.f32.xlu0 %v569
        %v571 = vpop.xlane.xlu0 %570
        %v572 = vmax.f32 %v533, %v534
        %573 = vmax.xlane.f32.xlu0 %v572
        %v574 = vpop.xlane.xlu0 %573
        %v575 = vmax.f32 %v535, %v536
        %576 = vmax.xlane.f32.xlu0 %v575
        %v577 = vpop.xlane.xlu0 %576
        %v578 = vmax.f32 %v537, %v538
        %579 = vmax.xlane.f32.xlu0 %v578
        %v580 = vpop.xlane.xlu0 %579
        %v581 = vmax.f32 %v539, %v540
        %582 = vmax.xlane.f32.xlu0 %v581
        %v583 = vpop.xlane.xlu0 %582
        %v584 = vmax.f32 %v541, %v542
        %585 = vmax.xlane.f32.xlu0 %v584
        %v586 = vpop.xlane.xlu0 %585
        %v587 = vmax.f32 %v543, %v544
        %588 = vmax.xlane.f32.xlu0 %v587
        %v589 = vpop.xlane.xlu0 %588
        %v590 = vmax.f32 %v545, %v546
        %591 = vmax.xlane.f32.xlu0 %v590
        %v592 = vpop.xlane.xlu0 %591
        %v593 = vmax.f32 %v547, %v548
        %594 = vmax.xlane.f32.xlu0 %v593
        %v595 = vpop.xlane.xlu0 %594
        %v596 = vmax.f32 %v549, %v550
        %597 = vmax.xlane.f32.xlu0 %v596
        %v598 = vpop.xlane.xlu0 %597
        %v599 = vsub.f32 %v519, %v553
        %v600 = vsub.f32 %v520, %v553
        %v601 = vsub.f32 %v521, %v556
        %v602 = vsub.f32 %v522, %v556
        %v603 = vsub.f32 %v523, %v559
        %v604 = vsub.f32 %v524, %v559
        %v605 = vsub.f32 %v525, %v562
        %v606 = vsub.f32 %v526, %v562
        %v607 = vsub.f32 %v527, %v565
        %v608 = vsub.f32 %v528, %v565
        %v609 = vsub.f32 %v529, %v568
        %v610 = vsub.f32 %v530, %v568
        %v611 = vsub.f32 %v531, %v571
        %v612 = vsub.f32 %v532, %v571
        %v613 = vsub.f32 %v533, %v574
        %v614 = vsub.f32 %v534, %v574
        %v615 = vsub.f32 %v535, %v577
        %v616 = vsub.f32 %v536, %v577
        %v617 = vsub.f32 %v537, %v580
        %v618 = vsub.f32 %v538, %v580
        %v619 = vsub.f32 %v539, %v583
        %v620 = vsub.f32 %v540, %v583
        %v621 = vsub.f32 %v541, %v586
        %v622 = vsub.f32 %v542, %v586
        %v623 = vsub.f32 %v543, %v589
        %v624 = vsub.f32 %v544, %v589
        %v625 = vsub.f32 %v545, %v592
        %v626 = vsub.f32 %v546, %v592
        %v627 = vsub.f32 %v547, %v595
        %v628 = vsub.f32 %v548, %v595
        %v629 = vsub.f32 %v549, %v598
        %v630 = vsub.f32 %v550, %v598
        %v631 = vmul.f32 %v599, 1.442695
        %v632 = vpow.pop %v631
        %v633 = vmul.f32 %v600, 1.442695
        %v634 = vpow.pop %v633
        %v635 = vmul.f32 %v601, 1.442695
        %v636 = vpow.pop %v635
        %v637 = vmul.f32 %v602, 1.442695
        %v638 = vpow.pop %v637
        %v639 = vmul.f32 %v603, 1.442695
        %v640 = vpow.pop %v639
        %v641 = vmul.f32 %v604, 1.442695
        %v642 = vpow.pop %v641
        %v643 = vmul.f32 %v605, 1.442695
        %v644 = vpow.pop %v643
        %v645 = vmul.f32 %v606, 1.442695
        %v646 = vpow.pop %v645
        %v647 = vmul.f32 %v607, 1.442695
        %v648 = vpow.pop %v647
        %v649 = vmul.f32 %v608, 1.442695
        %v650 = vpow.pop %v649
        %v651 = vmul.f32 %v609, 1.442695
        %v652 = vpow.pop %v651
        %v653 = vmul.f32 %v610, 1.442695
        %v654 = vpow.pop %v653
        %v655 = vmul.f32 %v611, 1.442695
        %v656 = vpow.pop %v655
        %v657 = vmul.f32 %v612, 1.442695
        %v658 = vpow.pop %v657
        %v659 = vmul.f32 %v613, 1.442695
        %v660 = vpow.pop %v659
        %v661 = vmul.f32 %v614, 1.442695
        %v662 = vpow.pop %v661
        %v663 = vmul.f32 %v615, 1.442695
        %v664 = vpow.pop %v663
        %v665 = vmul.f32 %v616, 1.442695
        %v666 = vpow.pop %v665
        %v667 = vmul.f32 %v617, 1.442695
        %v668 = vpow.pop %v667
        %v669 = vmul.f32 %v618, 1.442695
        %v670 = vpow.pop %v669
        %v671 = vmul.f32 %v619, 1.442695
        %v672 = vpow.pop %v671
        %v673 = vmul.f32 %v620, 1.442695
        %v674 = vpow.pop %v673
        %v675 = vmul.f32 %v621, 1.442695
        %v676 = vpow.pop %v675
        %v677 = vmul.f32 %v622, 1.442695
        %v678 = vpow.pop %v677
        %v679 = vmul.f32 %v623, 1.442695
        %v680 = vpow.pop %v679
        %v681 = vmul.f32 %v624, 1.442695
        %v682 = vpow.pop %v681
        %v683 = vmul.f32 %v625, 1.442695
        %v684 = vpow.pop %v683
        %v685 = vmul.f32 %v626, 1.442695
        %v686 = vpow.pop %v685
        %v687 = vmul.f32 %v627, 1.442695
        %v688 = vpow.pop %v687
        %v689 = vmul.f32 %v628, 1.442695
        %v690 = vpow.pop %v689
        %v691 = vmul.f32 %v629, 1.442695
        %v692 = vpow.pop %v691
        %v693 = vmul.f32 %v630, 1.442695
        %v694 = vpow.pop %v693
        %v695 = vadd.f32 %v632, %v634
        %696 = vadd.xlane.f32.xlu0 %v695
        %v697 = vpop.xlane.xlu0 %696
        %v698 = vadd.f32 %v636, %v638
        %699 = vadd.xlane.f32.xlu0 %v698
        %v700 = vpop.xlane.xlu0 %699
        %v701 = vadd.f32 %v640, %v642
        %702 = vadd.xlane.f32.xlu0 %v701
        %v703 = vpop.xlane.xlu0 %702
        %v704 = vadd.f32 %v644, %v646
        %705 = vadd.xlane.f32.xlu0 %v704
        %v706 = vpop.xlane.xlu0 %705
        %v707 = vadd.f32 %v648, %v650
        %708 = vadd.xlane.f32.xlu0 %v707
        %v709 = vpop.xlane.xlu0 %708
        %v710 = vadd.f32 %v652, %v654
        %711 = vadd.xlane.f32.xlu0 %v710
        %v712 = vpop.xlane.xlu0 %711
        %v713 = vadd.f32 %v656, %v658
        %714 = vadd.xlane.f32.xlu0 %v713
        %v715 = vpop.xlane.xlu0 %714
        %v716 = vadd.f32 %v660, %v662
        %717 = vadd.xlane.f32.xlu0 %v716
        %v718 = vpop.xlane.xlu0 %717
        %v719 = vadd.f32 %v664, %v666
        %720 = vadd.xlane.f32.xlu0 %v719
        %v721 = vpop.xlane.xlu0 %720
        %v722 = vadd.f32 %v668, %v670
        %723 = vadd.xlane.f32.xlu0 %v722
        %v724 = vpop.xlane.xlu0 %723
        %v725 = vadd.f32 %v672, %v674
        %726 = vadd.xlane.f32.xlu0 %v725
        %v727 = vpop.xlane.xlu0 %726
        %v728 = vadd.f32 %v676, %v678
        %729 = vadd.xlane.f32.xlu0 %v728
        %v730 = vpop.xlane.xlu0 %729
        %v731 = vadd.f32 %v680, %v682
        %732 = vadd.xlane.f32.xlu0 %v731
        %v733 = vpop.xlane.xlu0 %732
        %v734 = vadd.f32 %v684, %v686
        %735 = vadd.xlane.f32.xlu0 %v734
        %v736 = vpop.xlane.xlu0 %735
        %v737 = vadd.f32 %v688, %v690
        %738 = vadd.xlane.f32.xlu0 %v737
        %v739 = vpop.xlane.xlu0 %738
        %v740 = vadd.f32 %v692, %v694
        %741 = vadd.xlane.f32.xlu0 %v740
        %v742 = vpop.xlane.xlu0 %741
        %v743 = vrcp.pop %v697
        %v744 = vrcp.pop %v700
        %v745 = vrcp.pop %v703
        %v746 = vrcp.pop %v706
        %v747 = vrcp.pop %v709
        %v748 = vrcp.pop %v712
        %v749 = vrcp.pop %v715
        %v750 = vrcp.pop %v718
        %v751 = vrcp.pop %v721
        %v752 = vrcp.pop %v724
        %v753 = vrcp.pop %v727
        %v754 = vrcp.pop %v730
        %v755 = vrcp.pop %v733
        %v756 = vrcp.pop %v736
        %v757 = vrcp.pop %v739
        %v758 = vrcp.pop %v742
        %v759 = vmul.f32 %v632, %v743
        %v760 = vmul.f32 %v634, %v743
        %v761 = vmul.f32 %v636, %v744
        %v762 = vmul.f32 %v638, %v744
        %v763 = vmul.f32 %v640, %v745
        %v764 = vmul.f32 %v642, %v745
        %v765 = vmul.f32 %v644, %v746
        %v766 = vmul.f32 %v646, %v746
        %v767 = vmul.f32 %v648, %v747
        %v768 = vmul.f32 %v650, %v747
        %v769 = vmul.f32 %v652, %v748
        %v770 = vmul.f32 %v654, %v748
        %v771 = vmul.f32 %v656, %v749
        %v772 = vmul.f32 %v658, %v749
        %v773 = vmul.f32 %v660, %v750
        %v774 = vmul.f32 %v662, %v750
        %v775 = vmul.f32 %v664, %v751
        %v776 = vmul.f32 %v666, %v751
        %v777 = vmul.f32 %v668, %v752
        %v778 = vmul.f32 %v670, %v752
        %v779 = vmul.f32 %v672, %v753
        %v780 = vmul.f32 %v674, %v753
        %v781 = vmul.f32 %v676, %v754
        %v782 = vmul.f32 %v678, %v754
        %v783 = vmul.f32 %v680, %v755
        %v784 = vmul.f32 %v682, %v755
        %v785 = vmul.f32 %v684, %v756
        %v786 = vmul.f32 %v686, %v756
        %v787 = vmul.f32 %v688, %v757
        %v788 = vmul.f32 %v690, %v757
        %v789 = vmul.f32 %v692, %v758
        %v790 = vmul.f32 %v694, %v758
        %v791 = vpack.c.bf16 %v761, %v759
        %v792 = vpack.c.bf16 %v762, %v760
        %v793 = vpack.c.bf16 %v765, %v763
        %v794 = vpack.c.bf16 %v766, %v764
        %v795 = vpack.c.bf16 %v769, %v767
        %v796 = vpack.c.bf16 %v770, %v768
        %v797 = vpack.c.bf16 %v773, %v771
        %v798 = vpack.c.bf16 %v774, %v772
        %v799 = vpack.c.bf16 %v777, %v775
        %v800 = vpack.c.bf16 %v778, %v776
        %v801 = vpack.c.bf16 %v781, %v779
        %v802 = vpack.c.bf16 %v782, %v780
        %v803 = vpack.c.bf16 %v785, %v783
        %v804 = vpack.c.bf16 %v786, %v784
        %v805 = vpack.c.bf16 %v789, %v787
        %v806 = vpack.c.bf16 %v790, %v788
        %v807 = vld [vmem:[#allocation2] sm:$0xf]
        %v808 = vld [vmem:[#allocation2 + $0x4] sm:$0xf]
        %v809 = vld [vmem:[#allocation2 + $0x8] sm:$0xf]
        %v810 = vld [vmem:[#allocation2 + $0xc] sm:$0xf]
        %v811 = vld [vmem:[#allocation2 + $0x10] sm:$0xf]
        %v812 = vld [vmem:[#allocation2 + $0x14] sm:$0xf]
        %v813 = vld [vmem:[#allocation2 + $0x18] sm:$0xf]
        %v814 = vld [vmem:[#allocation2 + $0x1c] sm:$0xf]
        %v815 = vld [vmem:[#allocation2 + $0x20] sm:$0xf]
        %v816 = vld [vmem:[#allocation2 + $0x24] sm:$0xf]
        %v817 = vld [vmem:[#allocation2 + $0x28] sm:$0xf]
        %v818 = vld [vmem:[#allocation2 + $0x2c] sm:$0xf]
        %v819 = vld [vmem:[#allocation2 + $0x30] sm:$0xf]
        %v820 = vld [vmem:[#allocation2 + $0x34] sm:$0xf]
        %v821 = vld [vmem:[#allocation2 + $0x38] sm:$0xf]
        %v822 = vld [vmem:[#allocation2 + $0x3c] sm:$0xf]
        %v823 = vld [vmem:[#allocation2 + $0x40] sm:$0xf]
        %v824 = vld [vmem:[#allocation2 + $0x44] sm:$0xf]
        %v825 = vld [vmem:[#allocation2 + $0x48] sm:$0xf]
        %v826 = vld [vmem:[#allocation2 + $0x4c] sm:$0xf]
        %v827 = vld [vmem:[#allocation2 + $0x50] sm:$0xf]
        %v828 = vld [vmem:[#allocation2 + $0x54] sm:$0xf]
        %v829 = vld [vmem:[#allocation2 + $0x58] sm:$0xf]
        %v830 = vld [vmem:[#allocation2 + $0x5c] sm:$0xf]
        %v831 = vld [vmem:[#allocation2 + $0x60] sm:$0xf]
        %v832 = vld [vmem:[#allocation2 + $0x64] sm:$0xf]
        %v833 = vld [vmem:[#allocation2 + $0x68] sm:$0xf]
        %v834 = vld [vmem:[#allocation2 + $0x6c] sm:$0xf]
        %v835 = vld [vmem:[#allocation2 + $0x70] sm:$0xf]
        %v836 = vld [vmem:[#allocation2 + $0x74] sm:$0xf]
        %v837 = vld [vmem:[#allocation2 + $0x78] sm:$0xf]
        %v838 = vld [vmem:[#allocation2 + $0x7c] sm:$0xf]
        %v871 = vunpack.c.l.b16 %v807
        %v872 = vunpack.c.l.b16 %v808
        %v873 = vunpack.c.l.b16 %v809
        %v874 = vunpack.c.l.b16 %v810
        %v875 = vunpack.c.l.b16 %v811
        %v876 = vunpack.c.l.b16 %v812
        %v877 = vunpack.c.l.b16 %v813
        %v878 = vunpack.c.l.b16 %v814
        %v879 = vunpack.c.l.b16 %v815
        %v880 = vunpack.c.l.b16 %v816
        %v881 = vunpack.c.l.b16 %v817
        %v882 = vunpack.c.l.b16 %v818
        %v883 = vunpack.c.l.b16 %v819
        %v884 = vunpack.c.l.b16 %v820
        %v885 = vunpack.c.l.b16 %v821
        %v886 = vunpack.c.l.b16 %v822
        %v887 = vunpack.c.l.b16 %v823
        %v888 = vunpack.c.l.b16 %v824
        %v889 = vunpack.c.l.b16 %v825
        %v890 = vunpack.c.l.b16 %v826
        %v891 = vunpack.c.l.b16 %v827
        %v892 = vunpack.c.l.b16 %v828
        %v893 = vunpack.c.l.b16 %v829
        %v894 = vunpack.c.l.b16 %v830
        %v895 = vunpack.c.l.b16 %v831
        %v896 = vunpack.c.l.b16 %v832
        %v897 = vunpack.c.l.b16 %v833
        %v898 = vunpack.c.l.b16 %v834
        %v899 = vunpack.c.l.b16 %v835
        %v900 = vunpack.c.l.b16 %v836
        %v901 = vunpack.c.l.b16 %v837
        %v902 = vunpack.c.l.b16 %v838
        %v903 = vpack.c.b16 %v872, %v871
        %v904 = vpack.c.b16 %v874, %v873
        %v905 = vpack.c.b16 %v876, %v875
        %v906 = vpack.c.b16 %v878, %v877
        %v907 = vpack.c.b16 %v880, %v879
        %v908 = vpack.c.b16 %v882, %v881
        %v909 = vpack.c.b16 %v884, %v883
        %v910 = vpack.c.b16 %v886, %v885
        %v911 = vpack.c.b16 %v888, %v887
        %v912 = vpack.c.b16 %v890, %v889
        %v913 = vpack.c.b16 %v892, %v891
        %v914 = vpack.c.b16 %v894, %v893
        %v915 = vpack.c.b16 %v896, %v895
        %v916 = vpack.c.b16 %v898, %v897
        %v917 = vpack.c.b16 %v900, %v899
        %v918 = vpack.c.b16 %v902, %v901
        %935 = vmatpush.bf16.msra.mxu0 %v910
        %936 = vmatpush.bf16.msra.mxu0 %v909
        %937 = vmatpush.bf16.msra.mxu0 %v908
        %938 = vmatpush.bf16.msra.mxu0 %v907
        %939 = vmatpush.bf16.msra.mxu0 %v906
        %940 = vmatpush.bf16.msra.mxu0 %v905
        %941 = vmatpush.bf16.msra.mxu0 %v904
        %942 = vmatpush.bf16.msra.mxu0 %v903
        %943 = vmatmul.bf16.gmra.mxu0 %v791
        %v944 = vpop.f32.mrf.mxu0
        %v945 = vadd.f32 0.0, %v944
        %v946 = vpop.f32.mrf.mxu0
        %v947 = vadd.f32 0.0, %v946
        %948 = vmatmul.bf16.gmra.mxu0 %v793
        %v949 = vpop.f32.mrf.mxu0
        %v950 = vadd.f32 0.0, %v949
        %v951 = vpop.f32.mrf.mxu0
        %v952 = vadd.f32 0.0, %v951
        %953 = vmatmul.bf16.gmra.mxu0 %v795
        %v954 = vpop.f32.mrf.mxu0
        %v955 = vadd.f32 0.0, %v954
        %v956 = vpop.f32.mrf.mxu0
        %v957 = vadd.f32 0.0, %v956
        %958 = vmatmul.bf16.gmra.mxu0 %v797
        %v959 = vpop.f32.mrf.mxu0
        %v960 = vadd.f32 0.0, %v959
        %v961 = vpop.f32.mrf.mxu0
        %v962 = vadd.f32 0.0, %v961
        %963 = vmatmul.bf16.gmra.mxu0 %v799
        %v964 = vpop.f32.mrf.mxu0
        %v965 = vadd.f32 0.0, %v964
        %v966 = vpop.f32.mrf.mxu0
        %v967 = vadd.f32 0.0, %v966
        %968 = vmatmul.bf16.gmra.mxu0 %v801
        %v969 = vpop.f32.mrf.mxu0
        %v970 = vadd.f32 0.0, %v969
        %v971 = vpop.f32.mrf.mxu0
        %v972 = vadd.f32 0.0, %v971
        %973 = vmatmul.bf16.gmra.mxu0 %v803
        %v974 = vpop.f32.mrf.mxu0
        %v975 = vadd.f32 0.0, %v974
        %v976 = vpop.f32.mrf.mxu0
        %v977 = vadd.f32 0.0, %v976
        %978 = vmatmul.bf16.gmra.mxu0 %v805
        %v979 = vpop.f32.mrf.mxu0
        %v980 = vadd.f32 0.0, %v979
        %v981 = vpop.f32.mrf.mxu0
        %v982 = vadd.f32 0.0, %v981
        %983 = vdwg.mxu0
        %984 = vmatpush.bf16.msra.mxu0 %v918
        %985 = vmatpush.bf16.msra.mxu0 %v917
        %986 = vmatpush.bf16.msra.mxu0 %v916
        %987 = vmatpush.bf16.msra.mxu0 %v915
        %988 = vmatpush.bf16.msra.mxu0 %v914
        %989 = vmatpush.bf16.msra.mxu0 %v913
        %990 = vmatpush.bf16.msra.mxu0 %v912
        %991 = vmatpush.bf16.msra.mxu0 %v911
        %992 = vmatmul.bf16.gmra.mxu0 %v792
        %v993 = vpop.f32.mrf.mxu0
        %v994 = vadd.f32 %v945, %v993
        %v995 = vpop.f32.mrf.mxu0
        %v996 = vadd.f32 %v947, %v995
        %997 = vmatmul.bf16.gmra.mxu0 %v794
        %v998 = vpop.f32.mrf.mxu0
        %v999 = vadd.f32 %v950, %v998
        %v1000 = vpop.f32.mrf.mxu0
        %v1001 = vadd.f32 %v952, %v1000
        %1002 = vmatmul.bf16.gmra.mxu0 %v796
        %v1003 = vpop.f32.mrf.mxu0
        %v1004 = vadd.f32 %v955, %v1003
        %v1005 = vpop.f32.mrf.mxu0
        %v1006 = vadd.f32 %v957, %v1005
        %1007 = vmatmul.bf16.gmra.mxu0 %v798
        %v1008 = vpop.f32.mrf.mxu0
        %v1009 = vadd.f32 %v960, %v1008
        %v1010 = vpop.f32.mrf.mxu0
        %v1011 = vadd.f32 %v962, %v1010
        %1012 = vmatmul.bf16.gmra.mxu0 %v800
        %v1013 = vpop.f32.mrf.mxu0
        %v1014 = vadd.f32 %v965, %v1013
        %v1015 = vpop.f32.mrf.mxu0
        %v1016 = vadd.f32 %v967, %v1015
        %1017 = vmatmul.bf16.gmra.mxu0 %v802
        %v1018 = vpop.f32.mrf.mxu0
        %v1019 = vadd.f32 %v970, %v1018
        %v1020 = vpop.f32.mrf.mxu0
        %v1021 = vadd.f32 %v972, %v1020
        %1022 = vmatmul.bf16.gmra.mxu0 %v804
        %v1023 = vpop.f32.mrf.mxu0
        %v1024 = vadd.f32 %v975, %v1023
        %v1025 = vpop.f32.mrf.mxu0
        %v1026 = vadd.f32 %v977, %v1025
        %1027 = vmatmul.bf16.gmra.mxu0 %v806
        %v1028 = vpop.f32.mrf.mxu0
        %v1029 = vadd.f32 %v980, %v1028
        %v1030 = vpop.f32.mrf.mxu0
        %v1031 = vadd.f32 %v982, %v1030
        %1032 = vdwg.mxu0
        %vm1033 = vcmp.gt.f32.partialorder %v994, 0.0
        %vm1034 = vcmp.gt.f32.partialorder %v996, 0.0
        %vm1035 = vcmp.gt.f32.partialorder %v999, 0.0
        %vm1036 = vcmp.gt.f32.partialorder %v1001, 0.0
        %vm1037 = vcmp.gt.f32.partialorder %v1004, 0.0
        %vm1038 = vcmp.gt.f32.partialorder %v1006, 0.0
        %vm1039 = vcmp.gt.f32.partialorder %v1009, 0.0
        %vm1040 = vcmp.gt.f32.partialorder %v1011, 0.0
        %vm1041 = vcmp.gt.f32.partialorder %v1014, 0.0
        %vm1042 = vcmp.gt.f32.partialorder %v1016, 0.0
        %vm1043 = vcmp.gt.f32.partialorder %v1019, 0.0
        %vm1044 = vcmp.gt.f32.partialorder %v1021, 0.0
        %vm1045 = vcmp.gt.f32.partialorder %v1024, 0.0
        %vm1046 = vcmp.gt.f32.partialorder %v1026, 0.0
        %vm1047 = vcmp.gt.f32.partialorder %v1029, 0.0
        %vm1048 = vcmp.gt.f32.partialorder %v1031, 0.0
        %v1049 = vmin.f32 %v994, 0.0
        %v1050 = vmin.f32 %v996, 0.0
        %v1051 = vmin.f32 %v999, 0.0
        %v1052 = vmin.f32 %v1001, 0.0
        %v1053 = vmin.f32 %v1004, 0.0
        %v1054 = vmin.f32 %v1006, 0.0
        %v1055 = vmin.f32 %v1009, 0.0
        %v1056 = vmin.f32 %v1011, 0.0
        %v1057 = vmin.f32 %v1014, 0.0
        %v1058 = vmin.f32 %v1016, 0.0
        %v1059 = vmin.f32 %v1019, 0.0
        %v1060 = vmin.f32 %v1021, 0.0
        %v1061 = vmin.f32 %v1024, 0.0
        %v1062 = vmin.f32 %v1026, 0.0
        %v1063 = vmin.f32 %v1029, 0.0
        %v1064 = vmin.f32 %v1031, 0.0
        %v1065 = vmul.f32 %v1049, 1.442695
        %v1066 = vpow.pop %v1065
        %v1067 = vmul.f32 %v1050, 1.442695
        %v1068 = vpow.pop %v1067
        %v1069 = vmul.f32 %v1051, 1.442695
        %v1070 = vpow.pop %v1069
        %v1071 = vmul.f32 %v1052, 1.442695
        %v1072 = vpow.pop %v1071
        %v1073 = vmul.f32 %v1053, 1.442695
        %v1074 = vpow.pop %v1073
        %v1075 = vmul.f32 %v1054, 1.442695
        %v1076 = vpow.pop %v1075
        %v1077 = vmul.f32 %v1055, 1.442695
        %v1078 = vpow.pop %v1077
        %v1079 = vmul.f32 %v1056, 1.442695
        %v1080 = vpow.pop %v1079
        %v1081 = vmul.f32 %v1057, 1.442695
        %v1082 = vpow.pop %v1081
        %v1083 = vmul.f32 %v1058, 1.442695
        %v1084 = vpow.pop %v1083
        %v1085 = vmul.f32 %v1059, 1.442695
        %v1086 = vpow.pop %v1085
        %v1087 = vmul.f32 %v1060, 1.442695
        %v1088 = vpow.pop %v1087
        %v1089 = vmul.f32 %v1061, 1.442695
        %v1090 = vpow.pop %v1089
        %v1091 = vmul.f32 %v1062, 1.442695
        %v1092 = vpow.pop %v1091
        %v1093 = vmul.f32 %v1063, 1.442695
        %v1094 = vpow.pop %v1093
        %v1095 = vmul.f32 %v1064, 1.442695
        %v1096 = vpow.pop %v1095
        %v1097 = vsub.f32 %v1066, 1.0
        %v1098 = vsub.f32 %v1068, 1.0
        %v1099 = vsub.f32 %v1070, 1.0
        %v1100 = vsub.f32 %v1072, 1.0
        %v1101 = vsub.f32 %v1074, 1.0
        %v1102 = vsub.f32 %v1076, 1.0
        %v1103 = vsub.f32 %v1078, 1.0
        %v1104 = vsub.f32 %v1080, 1.0
        %v1105 = vsub.f32 %v1082, 1.0
        %v1106 = vsub.f32 %v1084, 1.0
        %v1107 = vsub.f32 %v1086, 1.0
        %v1108 = vsub.f32 %v1088, 1.0
        %v1109 = vsub.f32 %v1090, 1.0
        %v1110 = vsub.f32 %v1092, 1.0
        %v1111 = vsub.f32 %v1094, 1.0
        %v1112 = vsub.f32 %v1096, 1.0
        %v1113 = vsel %vm1033, %v994, %v1097
        %v1114 = vsel %vm1034, %v996, %v1098
        %v1115 = vsel %vm1035, %v999, %v1099
        %v1116 = vsel %vm1036, %v1001, %v1100
        %v1117 = vsel %vm1037, %v1004, %v1101
        %v1118 = vsel %vm1038, %v1006, %v1102
        %v1119 = vsel %vm1039, %v1009, %v1103
        %v1120 = vsel %vm1040, %v1011, %v1104
        %v1121 = vsel %vm1041, %v1014, %v1105
        %v1122 = vsel %vm1042, %v1016, %v1106
        %v1123 = vsel %vm1043, %v1019, %v1107
        %v1124 = vsel %vm1044, %v1021, %v1108
        %v1125 = vsel %vm1045, %v1024, %v1109
        %v1126 = vsel %vm1046, %v1026, %v1110
        %v1127 = vsel %vm1047, %v1029, %v1111
        %v1128 = vsel %vm1048, %v1031, %v1112
        %1129 = vst [vmem:[%s226] sm:$0xff] %v1113
        %1130 = vst [vmem:[%s226 + $0x8] sm:$0xff] %v1114
        %1131 = vst [vmem:[%s226 + $0x10] sm:$0xff] %v1115
        %1132 = vst [vmem:[%s226 + $0x18] sm:$0xff] %v1116
        %1133 = vst [vmem:[%s226 + $0x20] sm:$0xff] %v1117
        %1134 = vst [vmem:[%s226 + $0x28] sm:$0xff] %v1118
        %1135 = vst [vmem:[%s226 + $0x30] sm:$0xff] %v1119
        %1136 = vst [vmem:[%s226 + $0x38] sm:$0xff] %v1120
        %1137 = vst [vmem:[%s226 + $0x40] sm:$0xff] %v1121
        %1138 = vst [vmem:[%s226 + $0x48] sm:$0xff] %v1122
        %1139 = vst [vmem:[%s226 + $0x50] sm:$0xff] %v1123
        %1140 = vst [vmem:[%s226 + $0x58] sm:$0xff] %v1124
        %1141 = vst [vmem:[%s226 + $0x60] sm:$0xff] %v1125
        %1142 = vst [vmem:[%s226 + $0x68] sm:$0xff] %v1126
        %1143 = vst [vmem:[%s226 + $0x70] sm:$0xff] %v1127
        %1144 = vst [vmem:[%s226 + $0x78] sm:$0xff] %v1128
        %s1145 = sand.u32 %s121, 1
        %s1146 = scalar_lea.sflag [#allocation4], %s1145
        %s1147 = sand.u32 %s121, 1
        %s1148 = smul.addr %s1147, 128
        %s1149 = scalar_lea.vmem [#allocation5], %s1148
        // Predicated region
        $region41: #{tpu_custom_call.1} parent=35 // pred_check
          %p1150 = pneg %p131
        $region42: #{tpu_custom_call.1} parent=35 // pred_check_branch
          %1152 = sbr.rel (%p1150) target = $region44
        $region43: #{tpu_custom_call.1} parent=35 // pred_region
          %s1153 = smul.u32 16, %s19
          %1155 = vsyncadd %s1146, 0
          %s1156 = smul.addr %s1153, 8
          %s1157 = scalar_lea.hbm %s4, %s1156
          %s1158 = sshll.u32 %s1149, 4
          %s1159 = int_to_ptr.vmem [resolvable:$true] %s1158
          %s1160 = sshll.u32 %s1157, 4
          %s1161 = int_to_ptr.hbm [resolvable:$true] %s1160
          %1166 = dma.vmem_to_hbm [thread:$0]  %s1159, 2048, %s1161, %s1146, 128, 128, 8
        $region44: #{tpu_custom_call.1} parent=35 // pred_fallthru
          _
      $region36: #{tpu_custom_call.1} parent=5 // pred_fallthru
        _
      %p1167 = scmp.le.s32.totalorder 2, %s14
      // Predicated region
      $region45: #{tpu_custom_call.1} parent=5 // pred_check
        %p1168 = pneg %p1167
      $region46: #{tpu_custom_call.1} parent=5 // pred_check_branch
        %1170 = sbr.rel (%p1168) target = $region48
      $region47: #{tpu_custom_call.1} parent=5 // pred_region
        %s1171 = ssub.s32 %s14, 2
        // Predicated region
        $region49: #{tpu_custom_call.1} parent=47 // pred_check
          %p1172 = pneg %p137
        $region50: #{tpu_custom_call.1} parent=47 // pred_check_branch
          %1174 = sbr.rel (%p1172) target = $region52
        $region51: #{tpu_custom_call.1} parent=47 // pred_region
          %s1175 = sand.u32 %s122, 1
          %s1176 = scalar_lea.sflag [#allocation4], %s1175
          %s1177 = sand.u32 %s122, 1
          %s1178 = smul.addr %s1177, 128
          %s1179 = scalar_lea.vmem [#allocation5], %s1178
          %1181 = dma.done %s1176, 2048
        $region52: #{tpu_custom_call.1} parent=47 // pred_fallthru
          _
      $region48: #{tpu_custom_call.1} parent=5 // pred_fallthru
        _
    $region6: #{tpu_custom_call.1} parent=1 // loop_footer
      %s18 = sadd.s32 1, %s14
    $region7: #{tpu_custom_call.1} parent=1 // loop_footer_branch
      %13 = sbr.rel target = $region3
    $region8: #{tpu_custom_call.1} parent=1 // loop_exit
      _
    %1182 = vsyncpa [#allocation3], 1
    %s1183 = scalar_lea.sflag [#allocation3], 1
    %1184 = vsyncpa %s1183, 1
    %1185 = vsyncpa [#allocation4], 1
    %s1186 = scalar_lea.sflag [#allocation4], 1
    %1187 = vsyncpa %s1186, 1

</llo_original>
